<compile_context>
chip_gen: v5e
topology: v5e:2x2
jax: 0.10.0
libtpu: 0.0.40
codegen_flags: <defaults>
</compile_context>

<pallas_src>
import functools

import jax
import jax.numpy as jnp
import numpy as np
from jax import lax
from jax.experimental import pallas as pl
from jax.experimental.pallas import tpu as pltpu

# Gaussian kernel bandwidth multipliers (canonical DAN setup). The shared-exp
# trick below assumes exactly this set.
ALPHAS = (0.5, 1.0, 2.0)


def _round_up(x: int, m: int) -> int:
    return ((x + m - 1) // m) * m


def _mkmmd_kernel(scale_ref, fr_ref, fc_ref, sqr_ref, sqc_ref, out_ref, gram_acc,
                  *, batch, n_valid, tm, tn, linear):
    """Grid = (row tiles, col tiles, K tiles). K (feature dim) is innermost."""
    i = pl.program_id(0)
    j = pl.program_id(1)
    k = pl.program_id(2)
    ni = pl.num_programs(0)
    nj = pl.num_programs(1)
    nk = pl.num_programs(2)

    # Zero the scalar loss accumulator (resident output block) once.
    @pl.when((i == 0) & (j == 0) & (k == 0))
    def _init_out():
        out_ref[...] = jnp.zeros_like(out_ref)

    # Zero the Gram accumulator at the start of every K loop.
    @pl.when(k == 0)
    def _init_gram():
        gram_acc[...] = jnp.zeros_like(gram_acc)

    # Partial Gram for this (row, col) tile: (tm, tk) x (tn, tk) -> (tm, tn).
    gram_acc[...] += lax.dot_general(
        fr_ref[...], fc_ref[...],
        dimension_numbers=(((1,), (1,)), ((), ())),
        preferred_element_type=jnp.float32)

    # On the last K step: squared distances, shared-exp kernels, fused
    # weighted reduction into the scalar output.
    @pl.when(k == nk - 1)
    def _finish_tile():
        d2 = jnp.maximum(sqr_ref[...] + sqc_ref[...] - 2.0 * gram_acc[...], 0.0)

        # c = 1 / (2 * mean(D2));  alphas (0.5, 1, 2) share one exp:
        #   exp(-d2/(2*0.5*m)) = e^2,  exp(-d2/(2*1*m)) = e,  exp(-d2/(2*2*m)) = sqrt(e)
        e = jnp.exp(-d2 * scale_ref[0, 0])
        kmat = e * e + e + jnp.sqrt(e)

        # Index-matrix weights generated on the fly (no dense N x N input).
        r_idx = i * tm + lax.broadcasted_iota(jnp.int32, (tm, tn), 0)
        c_idx = j * tn + lax.broadcasted_iota(jnp.int32, (tm, tn), 1)
        valid = (r_idx < n_valid) & (c_idx < n_valid)
        r_src = r_idx < batch
        c_src = c_idx < batch
        same = r_src == c_src

        if linear:
            inv_b = 1.0 / float(batch)
            r_in = jnp.where(r_src, r_idx, r_idx - batch)   # index within block
            c_in = jnp.where(c_src, c_idx, c_idx - batch)
            r_next = jnp.where(r_in + 1 == batch, 0, r_in + 1)
            c_next = jnp.where(c_in + 1 == batch, 0, c_in + 1)
            succ = c_in == r_next       # col is (row+1) mod B
            pred = r_in == c_next       # row is (col+1) mod B
            w = jnp.where(same & succ, inv_b, 0.0)
            w = w + jnp.where(r_src & (~c_src) & (succ | pred), -inv_b, 0.0)
        else:
            pos_w = 1.0 / float(batch * (batch - 1))
            neg_w = -1.0 / float(batch * batch)
            diag = r_idx == c_idx
            w = jnp.where(same & (~diag), pos_w, 0.0)
            w = w + jnp.where(~same, neg_w, 0.0)

        w = jnp.where(valid, w, 0.0)
        out_ref[...] += jnp.sum(kmat * w)

    # Final bias term 2 / (B - 1) on the very last grid step.
    @pl.when((i == ni - 1) & (j == nj - 1) & (k == nk - 1))
    def _finalize():
        out_ref[...] += 2.0 / float(batch - 1)


def mk_mmd_loss(z_s: jax.Array, z_t: jax.Array, *, linear: bool = False,
                block_m: int = 256, block_k: int = 512) -> jax.Array:
    """MK-MMD loss. z_s, z_t: (B, D) activations (same shape). Returns a scalar."""
    assert z_s.shape == z_t.shape, "source/target activations must have the same shape"
    batch, d = z_s.shape
    n = 2 * batch

    f = jnp.concatenate([z_s, z_t], axis=0).astype(jnp.float32)       # (N, D)

    # O(N*D) prework: per-row squared norms + closed-form mean of D2:
    #   mean(D2) = 2 * mean_i ||f_i||^2 - 2 * || mean_i f_i ||^2
    sq = jnp.sum(f * f, axis=1, keepdims=True)                        # (N, 1)
    mean_sq = jnp.mean(sq)
    mu = jnp.mean(f, axis=0)
    mean_d2 = 2.0 * mean_sq - 2.0 * jnp.sum(mu * mu)
    # Guard against all-identical features (PyTorch would produce NaN here).
    scale = (1.0 / (2.0 * jnp.maximum(mean_d2, 1e-12))).reshape(1, 1).astype(jnp.float32)

    # Tile / pad selection (lane-dense, (8,128)-aligned blocks).
    if n <= block_m:
        tm = tn = _round_up(n, 8)
        n_pad = tm
    else:
        assert block_m % 128 == 0, "block_m must be a multiple of 128 when tiling N"
        tm = tn = block_m
        n_pad = _round_up(n, block_m)
    if d <= block_k:
        tk = _round_up(d, 128)
        d_pad = tk
    else:
        assert block_k % 128 == 0, "block_k must be a multiple of 128 when tiling D"
        tk = block_k
        d_pad = _round_up(d, block_k)

    f_pad = jnp.zeros((n_pad, d_pad), jnp.float32).at[:n, :d].set(f)
    sq_row = jnp.zeros((n_pad, 1), jnp.float32).at[:n, :].set(sq)
    sq_col = sq_row.reshape(1, n_pad)

    ni, nj, nk = n_pad // tm, n_pad // tn, d_pad // tk

    kernel = functools.partial(_mkmmd_kernel, batch=batch, n_valid=n,
                               tm=tm, tn=tn, linear=linear)

    out = pl.pallas_call(
        kernel,
        out_shape=jax.ShapeDtypeStruct((1, 1), jnp.float32),
        grid_spec=pltpu.PrefetchScalarGridSpec(
            num_scalar_prefetch=0,
            grid=(ni, nj, nk),
            in_specs=[
                pl.BlockSpec(memory_space=pltpu.MemorySpace.SMEM),      # scale (1,1)
                pl.BlockSpec((tm, tk), lambda i, j, k: (i, k)),         # row features
                pl.BlockSpec((tn, tk), lambda i, j, k: (j, k)),         # col features
                pl.BlockSpec((tm, 1), lambda i, j, k: (i, 0)),          # row sq norms
                pl.BlockSpec((1, tn), lambda i, j, k: (0, j)),          # col sq norms
            ],
            out_specs=pl.BlockSpec((1, 1), lambda i, j, k: (0, 0)),
            scratch_shapes=[pltpu.VMEM((tm, tn), jnp.float32)],         # Gram accumulator
        ),
        compiler_params=pltpu.CompilerParams(
            dimension_semantics=("arbitrary", "arbitrary", "arbitrary"),
            vmem_limit_bytes=32 * 1024 * 1024,
        ),
    )(scale, f_pad, f_pad, sq_row, sq_col)

    return out[0, 0]


# ----------------------------- reference check ------------------------------

def _build_index_matrix(batch_size: int, linear: bool) -> np.ndarray:
    """Plain-python replica of _update_index_matrix (reference only)."""
    n = 2 * batch_size
    m = np.zeros((n, n), dtype=np.float32)
    if linear:
        for i in range(batch_size):
            s1, s2 = i, (i + 1) % batch_size
            t1, t2 = s1 + batch_size, s2 + batch_size
            m[s1, s2] = 1.0 / batch_size
            m[t1, t2] = 1.0 / batch_size
            m[s1, t2] = -1.0 / batch_size
            m[s2, t1] = -1.0 / batch_size
    else:
        for i in range(batch_size):
            for j in range(batch_size):
                if i != j:
                    m[i, j] = 1.0 / (batch_size * (batch_size - 1))
                    m[i + batch_size, j + batch_size] = 1.0 / (batch_size * (batch_size - 1))
        for i in range(batch_size):
            for j in range(batch_size):
                m[i, j + batch_size] = -1.0 / (batch_size * batch_size)
                m[i + batch_size, j] = -1.0 / (batch_size * batch_size)
    return m


def _reference(z_s, z_t, linear=False):
    """Pure-JAX replica of the PyTorch forward."""
    b = z_s.shape[0]
    f = jnp.concatenate([z_s, z_t], axis=0).astype(jnp.float32)
    d2 = jnp.sum((f[None, :, :] - f[:, None, :]) ** 2, axis=-1)
    mean_d2 = jnp.mean(d2)
    kmat = sum(jnp.exp(-d2 / (2.0 * a * mean_d2)) for a in ALPHAS)
    idx = jnp.asarray(_build_index_matrix(b, linear))
    return jnp.sum(kmat * idx) + 2.0 / float(b - 1)


if __name__ == "__main__":
    key = jax.random.PRNGKey(0)
    k1, k2, k3, k4 = jax.random.split(key, 4)

    # Small shape from the module's usage (batch of feature activations).
    batch, feat_dim = 8, 32
    z_s = jax.random.normal(k1, (batch, feat_dim), dtype=jnp.float32)
    z_t = jax.random.normal(k2, (batch, feat_dim), dtype=jnp.float32)

    for lin in (False, True):
        loss = jax.block_until_ready(mk_mmd_loss(z_s, z_t, linear=lin))
        ref = jax.block_until_ready(_reference(z_s, z_t, linear=lin))
        assert np.allclose(np.asarray(loss), np.asarray(ref), rtol=1e-3, atol=1e-4), \
            (lin, float(loss), float(ref))

    # Second case that exercises padding + the multi-tile (row/col/K) grid path.
    batch2, feat2 = 160, 200
    z_s2 = jax.random.normal(k3, (batch2, feat2), dtype=jnp.float32)
    z_t2 = jax.random.normal(k4, (batch2, feat2), dtype=jnp.float32)
    loss2 = jax.block_until_ready(
        mk_mmd_loss(z_s2, z_t2, linear=False, block_m=128, block_k=128))
    ref2 = jax.block_until_ready(_reference(z_s2, z_t2, linear=False))
    assert np.allclose(np.asarray(loss2), np.asarray(ref2), rtol=1e-3, atol=1e-4), \
        (float(loss2), float(ref2))

    print("KERNEL_OK")
</pallas_src>

<mosaic_0001>
module attributes {stable_mosaic.version = 11 : i64} {
  func.func @_mkmmd_kernel(%arg0: i32, %arg1: i32, %arg2: i32, %arg3: memref<1x1xf32, #tpu.memory_space<smem>>, %arg4: memref<16x128xf32, #tpu.memory_space<vmem>>, %arg5: memref<16x128xf32, #tpu.memory_space<vmem>>, %arg6: memref<16x1xf32, #tpu.memory_space<vmem>>, %arg7: memref<1x16xf32, #tpu.memory_space<vmem>>, %arg8: memref<1x1xf32, #tpu.memory_space<vmem>>, %arg9: memref<16x16xf32, #tpu.memory_space<vmem>>) attributes {dimension_semantics = [#tpu.dimension_semantics<arbitrary>, #tpu.dimension_semantics<arbitrary>, #tpu.dimension_semantics<arbitrary>], iteration_bounds = array<i64: 1, 1, 1>, scalar_prefetch = 0 : i64, scratch_operands = 1 : i64, tpu.core_type = #tpu.core_type<tc>, window_params = [{transform_indices = @transform_0, window_bounds = array<i64: 1, 1>}, {transform_indices = @transform_1, window_bounds = array<i64: 16, 128>}, {transform_indices = @transform_2, window_bounds = array<i64: 16, 128>}, {transform_indices = @transform_3, window_bounds = array<i64: 16, 1>}, {transform_indices = @transform_4, window_bounds = array<i64: 1, 16>}, {pipeline_mode = #tpu.pipeline_mode<synchronous>, transform_indices = @transform_5, window_bounds = array<i64: 1, 1>}]} {
    %c0_i32 = arith.constant 0 : i32
    %0 = arith.cmpi eq, %arg0, %c0_i32 : i32
    %c0_i32_0 = arith.constant 0 : i32
    %1 = arith.cmpi eq, %arg1, %c0_i32_0 : i32
    %2 = arith.andi %0, %1 : i1
    %c0_i32_1 = arith.constant 0 : i32
    %3 = arith.cmpi eq, %arg2, %c0_i32_1 : i32
    %4 = arith.andi %2, %3 : i1
    %5 = arith.extui %4 : i1 to i32
    %c0_i32_2 = arith.constant 0 : i32
    %6 = arith.cmpi ne, %5, %c0_i32_2 : i32
    scf.if %6 {
      %cst_18 = arith.constant 0.000000e+00 : f32
      %26 = vector.broadcast %cst_18 : f32 to vector<1x1xf32>
      %c0_19 = arith.constant 0 : index
      %c0_20 = arith.constant 0 : index
      %27 = vector.load %arg8[%c0_19, %c0_20] : memref<1x1xf32, #tpu.memory_space<vmem>>, vector<1x1xf32>
      tpu.vector_store %arg8[%c0_19, %c0_20], %26 {strides = array<i32>} : memref<1x1xf32, #tpu.memory_space<vmem>>, vector<1x1xf32>,
    } else {
    }
    %c0_i32_3 = arith.constant 0 : i32
    %7 = arith.cmpi eq, %arg2, %c0_i32_3 : i32
    %8 = arith.extui %7 : i1 to i32
    %c0_i32_4 = arith.constant 0 : i32
    %9 = arith.cmpi ne, %8, %c0_i32_4 : i32
    scf.if %9 {
      %cst_18 = arith.constant 0.000000e+00 : f32
      %26 = vector.broadcast %cst_18 : f32 to vector<16x16xf32>
      %c0_19 = arith.constant 0 : index
      %c0_20 = arith.constant 0 : index
      %27 = vector.load %arg9[%c0_19, %c0_20] : memref<16x16xf32, #tpu.memory_space<vmem>>, vector<16x16xf32>
      tpu.vector_store %arg9[%c0_19, %c0_20], %26 {strides = array<i32>} : memref<16x16xf32, #tpu.memory_space<vmem>>, vector<16x16xf32>,
    } else {
    }
    %c0 = arith.constant 0 : index
    %c0_5 = arith.constant 0 : index
    %10 = vector.load %arg9[%c0, %c0_5] : memref<16x16xf32, #tpu.memory_space<vmem>>, vector<16x16xf32>
    %c0_6 = arith.constant 0 : index
    %c0_7 = arith.constant 0 : index
    %11 = vector.load %arg4[%c0_6, %c0_7] : memref<16x128xf32, #tpu.memory_space<vmem>>, vector<16x128xf32>
    %c0_8 = arith.constant 0 : index
    %c0_9 = arith.constant 0 : index
    %12 = vector.load %arg5[%c0_8, %c0_9] : memref<16x128xf32, #tpu.memory_space<vmem>>, vector<16x128xf32>
    %cst = arith.constant dense<0.000000e+00> : vector<16x16xf32>
    %13 = tpu.matmul %11, %12, %cst {dimension_numbers = #tpu.dot_dimension_numbers<[1], [1], [0], [0], [0, 0, 1, 0], [], []>} : vector<16x128xf32>, vector<16x128xf32>, vector<16x16xf32> -> vector<16x16xf32>
    %14 = arith.addf %10, %13 : vector<16x16xf32>
    %c0_10 = arith.constant 0 : index
    %c0_11 = arith.constant 0 : index
    %15 = vector.load %arg9[%c0_10, %c0_11] : memref<16x16xf32, #tpu.memory_space<vmem>>, vector<16x16xf32>
    tpu.vector_store %arg9[%c0_10, %c0_11], %14 {strides = array<i32>} : memref<16x16xf32, #tpu.memory_space<vmem>>, vector<16x16xf32>,
    %c0_i32_12 = arith.constant 0 : i32
    %16 = arith.cmpi eq, %arg2, %c0_i32_12 : i32
    %17 = arith.extui %16 : i1 to i32
    %c0_i32_13 = arith.constant 0 : i32
    %18 = arith.cmpi ne, %17, %c0_i32_13 : i32
    scf.if %18 {
      %c0_18 = arith.constant 0 : index
      %c0_19 = arith.constant 0 : index
      %26 = vector.load %arg6[%c0_18, %c0_19] : memref<16x1xf32, #tpu.memory_space<vmem>>, vector<16x1xf32>
      %c0_20 = arith.constant 0 : index
      %c0_21 = arith.constant 0 : index
      %27 = vector.load %arg7[%c0_20, %c0_21] : memref<1x16xf32, #tpu.memory_space<vmem>>, vector<1x16xf32>
      %28 = vector.broadcast %26 : vector<16x1xf32> to vector<16x16xf32>
      %29 = vector.broadcast %27 : vector<1x16xf32> to vector<16x16xf32>
      %30 = arith.addf %28, %29 : vector<16x16xf32>
      %c0_22 = arith.constant 0 : index
      %c0_23 = arith.constant 0 : index
      %31 = vector.load %arg9[%c0_22, %c0_23] : memref<16x16xf32, #tpu.memory_space<vmem>>, vector<16x16xf32>
      %cst_24 = arith.constant 2.000000e+00 : f32
      %32 = vector.broadcast %cst_24 : f32 to vector<16x16xf32>
      %33 = arith.mulf %32, %31 : vector<16x16xf32>
      %34 = arith.subf %30, %33 : vector<16x16xf32>
      %cst_25 = arith.constant 0.000000e+00 : f32
      %35 = vector.broadcast %cst_25 : f32 to vector<16x16xf32>
      %36 = arith.maximumf %34, %35 : vector<16x16xf32>
      %cst_26 = arith.constant 0.000000e+00 : f32
      %37 = vector.broadcast %cst_26 : f32 to vector<16x16xf32>
      %38 = arith.subf %37, %36 : vector<16x16xf32>
      %c0_27 = arith.constant 0 : index
      %c0_28 = arith.constant 0 : index
      %39 = memref.load %arg3[%c0_27, %c0_28] : memref<1x1xf32, #tpu.memory_space<smem>>
      %40 = vector.broadcast %39 : f32 to vector<16x16xf32>
      %41 = arith.mulf %38, %40 : vector<16x16xf32>
      %42 = math.exp %41 : vector<16x16xf32>
      %43 = arith.mulf %42, %42 : vector<16x16xf32>
      %44 = arith.addf %43, %42 : vector<16x16xf32>
      %45 = math.sqrt %42 : vector<16x16xf32>
      %46 = arith.addf %44, %45 : vector<16x16xf32>
      %c16_i32 = arith.constant 16 : i32
      %47 = arith.muli %arg0, %c16_i32 : i32
      %48 = tpu.iota {dimensions = array<i32: 0>} : vector<16x16xi32>
      %49 = vector.broadcast %47 : i32 to vector<16x16xi32>
      %50 = arith.addi %49, %48 : vector<16x16xi32>
      %c16_i32_29 = arith.constant 16 : i32
      %51 = arith.muli %arg1, %c16_i32_29 : i32
      %52 = tpu.iota {dimensions = array<i32: 1>} : vector<16x16xi32>
      %53 = vector.broadcast %51 : i32 to vector<16x16xi32>
      %54 = arith.addi %53, %52 : vector<16x16xi32>
      %c16_i32_30 = arith.constant 16 : i32
      %55 = vector.broadcast %c16_i32_30 : i32 to vector<16x16xi32>
      %56 = arith.cmpi slt, %50, %55 : vector<16x16xi32>
      %c16_i32_31 = arith.constant 16 : i32
      %57 = vector.broadcast %c16_i32_31 : i32 to vector<16x16xi32>
      %58 = arith.cmpi slt, %54, %57 : vector<16x16xi32>
      %59 = arith.andi %56, %58 : vector<16x16xi1>
      %c8_i32 = arith.constant 8 : i32
      %60 = vector.broadcast %c8_i32 : i32 to vector<16x16xi32>
      %61 = arith.cmpi slt, %50, %60 : vector<16x16xi32>
      %c8_i32_32 = arith.constant 8 : i32
      %62 = vector.broadcast %c8_i32_32 : i32 to vector<16x16xi32>
      %63 = arith.cmpi slt, %54, %62 : vector<16x16xi32>
      %64 = arith.xori %61, %63 : vector<16x16xi1>
      %cst_33 = arith.constant dense<true> : vector<16x16xi1>
      %65 = arith.xori %64, %cst_33 : vector<16x16xi1>
      %66 = arith.cmpi eq, %50, %54 : vector<16x16xi32>
      %cst_34 = arith.constant dense<true> : vector<16x16xi1>
      %67 = arith.xori %66, %cst_34 : vector<16x16xi1>
      %68 = arith.andi %65, %67 : vector<16x16xi1>
      %cst_35 = arith.constant 0.0178571437 : f32
      %cst_36 = arith.constant 0.000000e+00 : f32
      %69 = vector.broadcast %cst_35 : f32 to vector<16x16xf32>
      %70 = vector.broadcast %cst_36 : f32 to vector<16x16xf32>
      %71 = arith.select %68, %69, %70 : vector<16x16xi1>, vector<16x16xf32>
      %cst_37 = arith.constant dense<true> : vector<16x16xi1>
      %72 = arith.xori %65, %cst_37 : vector<16x16xi1>
      %cst_38 = arith.constant -1.562500e-02 : f32
      %cst_39 = arith.constant 0.000000e+00 : f32
      %73 = vector.broadcast %cst_38 : f32 to vector<16x16xf32>
      %74 = vector.broadcast %cst_39 : f32 to vector<16x16xf32>
      %75 = arith.select %72, %73, %74 : vector<16x16xi1>, vector<16x16xf32>
      %76 = arith.addf %71, %75 : vector<16x16xf32>
      %cst_40 = arith.constant 0.000000e+00 : f32
      %77 = vector.broadcast %cst_40 : f32 to vector<16x16xf32>
      %78 = arith.select %59, %76, %77 : vector<16x16xi1>, vector<16x16xf32>
      %c0_41 = arith.constant 0 : index
      %c0_42 = arith.constant 0 : index
      %79 = vector.load %arg8[%c0_41, %c0_42] : memref<1x1xf32, #tpu.memory_space<vmem>>, vector<1x1xf32>
      %80 = arith.mulf %46, %78 : vector<16x16xf32>
      %81 = vector.shape_cast %80 : vector<16x16xf32> to vector<1x16x16xf32>
      %cst_43 = arith.constant dense<0.000000e+00> : vector<1xf32>
      %82 = vector.multi_reduction <add>, %81, %cst_43 [1, 2] : vector<1x16x16xf32> to vector<1xf32>
      %83 = vector.shape_cast %82 : vector<1xf32> to vector<1x1x1xf32>
      %84 = vector.extract %83[0, 0, 0] : f32 from vector<1x1x1xf32>
      %85 = vector.broadcast %84 : f32 to vector<1x1xf32>
      %86 = arith.addf %79, %85 : vector<1x1xf32>
      %c0_44 = arith.constant 0 : index
      %c0_45 = arith.constant 0 : index
      %87 = vector.load %arg8[%c0_44, %c0_45] : memref<1x1xf32, #tpu.memory_space<vmem>>, vector<1x1xf32>
      tpu.vector_store %arg8[%c0_44, %c0_45], %86 {strides = array<i32>} : memref<1x1xf32, #tpu.memory_space<vmem>>, vector<1x1xf32>,
    } else {
    }
    %c0_i32_14 = arith.constant 0 : i32
    %19 = arith.cmpi eq, %arg0, %c0_i32_14 : i32
    %c0_i32_15 = arith.constant 0 : i32
    %20 = arith.cmpi eq, %arg1, %c0_i32_15 : i32
    %21 = arith.andi %19, %20 : i1
    %c0_i32_16 = arith.constant 0 : i32
    %22 = arith.cmpi eq, %arg2, %c0_i32_16 : i32
    %23 = arith.andi %21, %22 : i1
    %24 = arith.extui %23 : i1 to i32
    %c0_i32_17 = arith.constant 0 : i32
    %25 = arith.cmpi ne, %24, %c0_i32_17 : i32
    scf.if %25 {
      %c0_18 = arith.constant 0 : index
      %c0_19 = arith.constant 0 : index
      %26 = vector.load %arg8[%c0_18, %c0_19] : memref<1x1xf32, #tpu.memory_space<vmem>>, vector<1x1xf32>
      %cst_20 = arith.constant 0.285714298 : f32
      %27 = vector.broadcast %cst_20 : f32 to vector<1x1xf32>
      %28 = arith.addf %26, %27 : vector<1x1xf32>
      %c0_21 = arith.constant 0 : index
      %c0_22 = arith.constant 0 : index
      %29 = vector.load %arg8[%c0_21, %c0_22] : memref<1x1xf32, #tpu.memory_space<vmem>>, vector<1x1xf32>
      tpu.vector_store %arg8[%c0_21, %c0_22], %28 {strides = array<i32>} : memref<1x1xf32, #tpu.memory_space<vmem>>, vector<1x1xf32>,
    } else {
    }
    return
  }
  func.func @transform_0(%arg0: i32, %arg1: i32, %arg2: i32) -> (i32, i32) {
    %c0_i32 = arith.constant 0 : i32
    %c0_i32_0 = arith.constant 0 : i32
    %c0_i32_1 = arith.constant 0 : i32
    return %c0_i32, %c0_i32_0 : i32, i32
  }
  func.func @transform_1(%arg0: i32, %arg1: i32, %arg2: i32) -> (i32, i32) {
    %c0_i32 = arith.constant 0 : i32
    return %arg0, %arg2 : i32, i32
  }
  func.func @transform_2(%arg0: i32, %arg1: i32, %arg2: i32) -> (i32, i32) {
    %c0_i32 = arith.constant 0 : i32
    return %arg1, %arg2 : i32, i32
  }
  func.func @transform_3(%arg0: i32, %arg1: i32, %arg2: i32) -> (i32, i32) {
    %c0_i32 = arith.constant 0 : i32
    %c0_i32_0 = arith.constant 0 : i32
    return %arg0, %c0_i32 : i32, i32
  }
  func.func @transform_4(%arg0: i32, %arg1: i32, %arg2: i32) -> (i32, i32) {
    %c0_i32 = arith.constant 0 : i32
    %c0_i32_0 = arith.constant 0 : i32
    return %c0_i32, %arg1 : i32, i32
  }
  func.func @transform_5(%arg0: i32, %arg1: i32, %arg2: i32) -> (i32, i32) {
    %c0_i32 = arith.constant 0 : i32
    %c0_i32_0 = arith.constant 0 : i32
    %c0_i32_1 = arith.constant 0 : i32
    return %c0_i32, %c0_i32_0 : i32, i32
  }
}

</mosaic_0001>

<llo_original>
// kernel: tpu_custom_call.1
$region0: #{tpu_custom_call.1}
  #allocation0 [shape = 'u32[]', space=smem, size = 0x4, offset = 0x4, fixed_abs, tag = 'smem constant byte address 0x4 - core index']
  #allocation1 [shape = 'u32[72,128]{1,0:T(1,128)}', space=vmem, size = 0x9000, scoped, tag = 'internal scratch']
  #allocation2 [shape = 'f32[16,16]{1,0:T(8,128)}', space=vmem, size = 0x2000, scoped, tag = 'scratch operand']
  #allocation3 [shape = 'f32[1,1]{1,0:T(1,128)S(6)}', space=smem, size = 0x200, scoped, tag = 'scoped memory for tpu_custom_call.1']
  %s0 = inlined_call_operand.<no memory space> [shape: f32[1,1], index: 0, kind: input, shape index: {}]
  %s1 = inlined_call_operand.vmem [shape: f32[16,128], index: 1, kind: input, shape index: {}]
  %s2 = inlined_call_operand.hbm [shape: f32[16,128], index: 2, kind: input, shape index: {}]
  %s3 = inlined_call_operand.vmem [shape: f32[16,1], index: 3, kind: input, shape index: {}]
  %s4 = inlined_call_operand.vmem [shape: f32[1,16], index: 4, kind: input, shape index: {}]
  %s5 = inlined_call_operand.hbm [shape: f32[1,1], index: 5, kind: output, shape index: {}]
  %s6 = sld [smem:[#allocation0]]
  $region50: #{tpu_custom_call.1} parent=0
    _
  %s8 = ssub.s32 1, %s6
  %s9 = scalar_select 0, %s8, %s6
  %10 = sst [smem:[#allocation3]] %s0
  $region1: #{tpu_custom_call.1} parent=0
    #allocation4 [shape = 'u8[8192]{0}', space=vmem, size = 0x2000, scoped, tag = 'input window, operand 2, single buffered']
    #allocation5 [shape = 's32[1]{0}', space=sflag, size = 0x4, scoped, tag = 'scoped memory for tpu_custom_call.1']
    #allocation6 [shape = 's32[1]{0}', space=sflag, size = 0x4, scoped, tag = 'scoped memory for tpu_custom_call.1']
    #allocation7 [shape = 'u8[512]{0}', space=vmem, size = 0x400, scoped, tag = 'output window, operand 0, single buffered']
    %11 = vsyncpa [#allocation5], 0
    %12 = vsyncpa [#allocation6], 0
    // Predicated region
    $region2: #{tpu_custom_call.1} parent=1 // pred_check
      _
    $region3: #{tpu_custom_call.1} parent=1 // pred_check_branch
      %14 = sbr.rel (0) target = $region5
    $region4: #{tpu_custom_call.1} parent=1 // pred_region
      _
    $region5: #{tpu_custom_call.1} parent=1 // pred_fallthru
      _
    // Predicated region
    $region6: #{tpu_custom_call.1} parent=1 // pred_check
      _
    $region7: #{tpu_custom_call.1} parent=1 // pred_check_branch
      %16 = sbr.rel (0) target = $region9
    $region8: #{tpu_custom_call.1} parent=1 // pred_region
      _
    $region9: #{tpu_custom_call.1} parent=1 // pred_fallthru
      _
    // Predicated region
    $region10: #{tpu_custom_call.1} parent=1 // pred_check
      _
    $region11: #{tpu_custom_call.1} parent=1 // pred_check_branch
      %18 = sbr.rel (0) target = $region13
    $region12: #{tpu_custom_call.1} parent=1 // pred_region
      %20 = vsyncadd [#allocation5], 0
      %s21 = sshll.u32 %s2, 4
      %s22 = int_to_ptr.hbm [resolvable:$true] %s21
      %s23 = sshll.u32 [#allocation4], 4
      %s24 = int_to_ptr.vmem [resolvable:$true] %s23
      %29 = dma.hbm_to_vmem [thread:$0]  %s22, 256, %s24, [#allocation5], 128, 128, 8
    $region13: #{tpu_custom_call.1} parent=1 // pred_fallthru
      _
    // Predicated region
    $region14: #{tpu_custom_call.1} parent=1 // pred_check
      _
    $region15: #{tpu_custom_call.1} parent=1 // pred_check_branch
      %31 = sbr.rel (0) target = $region17
    $region16: #{tpu_custom_call.1} parent=1 // pred_region
      _
    $region17: #{tpu_custom_call.1} parent=1 // pred_fallthru
      _
    // Predicated region
    $region18: #{tpu_custom_call.1} parent=1 // pred_check
      _
    $region19: #{tpu_custom_call.1} parent=1 // pred_check_branch
      %33 = sbr.rel (0) target = $region21
    $region20: #{tpu_custom_call.1} parent=1 // pred_region
      _
    $region21: #{tpu_custom_call.1} parent=1 // pred_fallthru
      _
    // Predicated region
    $region22: #{tpu_custom_call.1} parent=1 // pred_check
      _
    $region23: #{tpu_custom_call.1} parent=1 // pred_check_branch
      %35 = sbr.rel (0) target = $region25
    $region24: #{tpu_custom_call.1} parent=1 // pred_region
      %37 = dma.done [#allocation5], 256
    $region25: #{tpu_custom_call.1} parent=1 // pred_fallthru
      _
    %p38 = scmp.eq.s32.totalorder 0, 0
    %p39 = scmp.eq.s32.totalorder 0, 0
    %p40 = pnand %p38, %p39
    %p41 = pneg %p40
    %p42 = scmp.eq.s32.totalorder 0, 0
    %p43 = pnand %p41, %p42
    %p44 = pneg %p43
    // Predicated region
    $region26: #{tpu_custom_call.1} parent=1 // pred_check
      _
    $region27: #{tpu_custom_call.1} parent=1 // pred_check_branch
      %46 = sbr.rel (%p43) target = $region29
    $region28: #{tpu_custom_call.1} parent=1 // pred_region
      %vm47 = vcmask 0
      %48 = vst.msk [vmem:[#allocation7] sm:$0x1] %vm47, 0.0
    $region29: #{tpu_custom_call.1} parent=1 // pred_fallthru
      _
    // Predicated region
    $region30: #{tpu_custom_call.1} parent=1 // pred_check
      %p49 = pneg %p42
    $region31: #{tpu_custom_call.1} parent=1 // pred_check_branch
      %51 = sbr.rel (%p49) target = $region33
    $region32: #{tpu_custom_call.1} parent=1 // pred_region
      %vm52 = vcmask 130048
      %53 = vst.msk [vmem:[#allocation2] sm:$0xff] %vm52, 0.0
      %54 = vst.msk [vmem:[#allocation2 + $0x8] sm:$0xff] %vm52, 0.0
    $region33: #{tpu_custom_call.1} parent=1 // pred_fallthru
      _
    %v55 = vld [vmem:[#allocation2] sm:$0xff]
    %v56 = vld [vmem:[#allocation2 + $0x8] sm:$0xff]
    %v57 = vld [vmem:[%s1] sm:$0xff]
    %v58 = vld [vmem:[%s1 + $0x8] sm:$0xff]
    %v59 = vld [vmem:[#allocation4] sm:$0xff]
    %v60 = vld [vmem:[#allocation4 + $0x8] sm:$0xff]
    %61 = vmatpush.xpose.msra.mxu0 0.0
    %62 = vmatpush.xpose.msra.mxu0 0.0
    %63 = vmatpush.xpose.msra.mxu0 0.0
    %64 = vmatpush.xpose.msra.mxu0 0.0
    %65 = vmatpush.xpose.msra.mxu0 0.0
    %66 = vmatpush.xpose.msra.mxu0 0.0
    %67 = vmatpush.xpose.msra.mxu0 0.0
    %68 = vmatpush.xpose.msra.mxu0 0.0
    %69 = vmatpush.xpose.msra.mxu0 0.0
    %70 = vmatpush.xpose.msra.mxu0 0.0
    %71 = vmatpush.xpose.msra.mxu0 0.0
    %72 = vmatpush.xpose.msra.mxu0 0.0
    %73 = vmatpush.xpose.msra.mxu0 0.0
    %74 = vmatpush.xpose.msra.mxu0 0.0
    %75 = vmatpush.xpose.msra.mxu0 %v60
    %76 = vmatpush.xpose.msra.mxu0 %v59
    %77 = vmatmul.f32.gmra.mxu0 %v57
    %v78 = vpop.f32.mrf.mxu0
    %v79 = vadd.f32 0.0, %v78
    %80 = vmatmul.f32.gmra.mxu0 %v58
    %v81 = vpop.f32.mrf.mxu0
    %v82 = vadd.f32 0.0, %v81
    %83 = vdwg.mxu0
    %v84 = vadd.f32 %v55, %v79
    %v85 = vadd.f32 %v56, %v82
    %vm86 = vcmask 130048
    %87 = vst.msk [vmem:[#allocation2] sm:$0xff] %vm86, %v84
    %88 = vst.msk [vmem:[#allocation2 + $0x8] sm:$0xff] %vm86, %v85
    // Predicated region
    $region34: #{tpu_custom_call.1} parent=1 // pred_check
      %p89 = pneg %p42
    $region35: #{tpu_custom_call.1} parent=1 // pred_check_branch
      %91 = sbr.rel (%p89) target = $region37
    $region36: #{tpu_custom_call.1} parent=1 // pred_region
      %v92 = vld [vmem:[%s3] sm:$0xff]
      %v93 = vld [vmem:[%s3 + $0x8] sm:$0xff]
      %v94 = vld [vmem:[%s4] sm:$0x1]
      %96 = vset.pattern.permute.xlu0 0
      %97 = vperm.xlu0 %96, %v92
      %v98 = vpop.permute.xlu0 %97
      %101 = vset.pattern.permute.xlu0 0
      %102 = vperm.xlu0 %101, %v93
      %v103 = vpop.permute.xlu0 %102
      %v106 = vperm.slane %v94, 0
      %v108 = vadd.f32 %v98, %v106
      %v109 = vadd.f32 %v103, %v106
      %v110 = vld [vmem:[#allocation2] sm:$0xff]
      %v111 = vld [vmem:[#allocation2 + $0x8] sm:$0xff]
      %v112 = vmul.f32 %v110, 2.0
      %v113 = vmul.f32 %v111, 2.0
      %v114 = vsub.f32 %v108, %v112
      %v115 = vsub.f32 %v109, %v113
      %v116 = vmax.f32 %v114, 0.0
      %v117 = vmax.f32 %v115, 0.0
      %v118 = vsub.f32 0.0, %v116
      %v119 = vsub.f32 0.0, %v117
      %s120 = sld [smem:[#allocation3]]
      %v121 = vstv %s120
      %v122 = vmul.f32 %v118, %v121
      %v123 = vmul.f32 %v119, %v121
      %v124 = vmul.f32 %v122, 1.442695
      %v125 = vpow.pop %v124
      %v126 = vmul.f32 %v123, 1.442695
      %v127 = vpow.pop %v126
      %v128 = vmul.f32 %v125, %v125
      %v129 = vmul.f32 %v127, %v127
      %v130 = vadd.f32 %v128, %v125
      %v131 = vadd.f32 %v129, %v127
      %v132 = vrsqrt.pop %v125
      %v133 = vmul.f32 %v132, %v125
      %v134 = vmul.f32 %v133, %v132
      %v135 = vmul.f32 0.5, %v134
      %v136 = vsub.f32 1.5, %v135
      %v137 = vmul.f32 %v132, %v136
      %v138 = vmul.f32 %v125, %v137
      %vm139 = vcmp.eq.f32.partialorder %v125, inf
      %v140 = vsel %vm139, %v125, %v138
      %vm141 = vcmp.eq.f32.partialorder %v125, 0.0
      %v142 = vand.u32 %v125, 2147483648
      %v143 = vsel %vm141, %v142, %v140
      %v144 = vrsqrt.pop %v127
      %v145 = vmul.f32 %v144, %v127
      %v146 = vmul.f32 %v145, %v144
      %v147 = vmul.f32 0.5, %v146
      %v148 = vsub.f32 1.5, %v147
      %v149 = vmul.f32 %v144, %v148
      %v150 = vmul.f32 %v127, %v149
      %vm151 = vcmp.eq.f32.partialorder %v127, inf
      %v152 = vsel %vm151, %v127, %v150
      %vm153 = vcmp.eq.f32.partialorder %v127, 0.0
      %v154 = vand.u32 %v127, 2147483648
      %v155 = vsel %vm153, %v154, %v152
      %v156 = vadd.f32 %v130, %v143
      %v157 = vadd.f32 %v131, %v155
      %s158 = smul.u32 0, 16
      %v159 = vlaneseq
      %v160 = vshrl.u32 %v159, 7
      %v161 = vadd.s32 %v160, 8
      %v162 = vstv %s158
      %v163 = vadd.s32 %v162, %v160
      %v164 = vadd.s32 %v162, %v161
      %s165 = smul.u32 0, 16
      %v166 = vlaneseq
      %v167 = vand.u32 %v166, 127
      %v168 = vstv %s165
      %v169 = vadd.s32 %v168, %v167
      %vm170 = vcmp.lt.s32.totalorder %v163, 16
      %vm171 = vcmp.lt.s32.totalorder %v164, 16
      %vm172 = vcmp.lt.s32.totalorder %v169, 16
      %vm173 = vmand %vm170, %vm172
      %vm174 = vmand %vm171, %vm172
      %vm175 = vcmp.lt.s32.totalorder %v163, 8
      %vm176 = vcmp.lt.s32.totalorder %v164, 8
      %vm177 = vcmp.lt.s32.totalorder %v169, 8
      %vm178 = vmxor %vm175, %vm177
      %vm179 = vmxor %vm176, %vm177
      %vm180 = vmxor %vm178, 1
      %vm181 = vmxor %vm179, 1
      %vm182 = vcmp.eq.s32.totalorder %v163, %v169
      %vm183 = vcmp.eq.s32.totalorder %v164, %v169
      %vm184 = vmxor %vm182, 1
      %vm185 = vmxor %vm183, 1
      %vm186 = vmand %vm180, %vm184
      %vm187 = vmand %vm181, %vm185
      %v188 = vsel %vm186, 0.017857144, 0.0
      %v189 = vsel %vm187, 0.017857144, 0.0
      %v190 = vsel %vm178, -0.015625, 0.0
      %v191 = vsel %vm179, -0.015625, 0.0
      %v192 = vadd.f32 %v188, %v190
      %v193 = vadd.f32 %v189, %v191
      %v194 = vsel %vm173, %v192, 0.0
      %v195 = vsel %vm174, %v193, 0.0
      %v196 = vld [vmem:[#allocation7] sm:$0x1]
      %v197 = vmul.f32 %v156, %v194
      %v198 = vmul.f32 %v157, %v195
      %v199 = vsel %vm86, %v197, 0.0
      %v200 = vsel %vm86, %v198, 0.0
      %v201 = vadd.f32 %v199, %v200
      %202 = vadd.xlane.f32.xlu0 %v201
      %v203 = vpop.xlane.xlu0 %202
      %v204 = vrot.slane %v203, 4
      %v205 = vadd.f32 %v203, %v204
      %v206 = vrot.slane %v205, 2
      %v207 = vadd.f32 %v205, %v206
      %v208 = vrot.slane %v207, 1
      %v209 = vadd.f32 %v207, %v208
      %s210 = vtos %v209
      %v211 = vstv %s210
      %v212 = vadd.f32 %v196, %v211
      %vm213 = vcmask 0
      %214 = vst.msk [vmem:[#allocation7] sm:$0x1] %vm213, %v212
    $region37: #{tpu_custom_call.1} parent=1 // pred_fallthru
      _
    // Predicated region
    $region38: #{tpu_custom_call.1} parent=1 // pred_check
      _
    $region39: #{tpu_custom_call.1} parent=1 // pred_check_branch
      %216 = sbr.rel (%p43) target = $region41
    $region40: #{tpu_custom_call.1} parent=1 // pred_region
      %v217 = vld [vmem:[#allocation7] sm:$0x1]
      %v218 = vadd.f32 %v217, 0.2857143
      %vm219 = vcmask 0
      %220 = vst.msk [vmem:[#allocation7] sm:$0x1] %vm219, %v218
    $region41: #{tpu_custom_call.1} parent=1 // pred_fallthru
      _
    // Predicated region
    $region42: #{tpu_custom_call.1} parent=1 // pred_check
      _
    $region43: #{tpu_custom_call.1} parent=1 // pred_check_branch
      %222 = sbr.rel (0) target = $region45
    $region44: #{tpu_custom_call.1} parent=1 // pred_region
      %224 = vsyncadd [#allocation6], 0
      %s226 = sshll.u32 [#allocation7], 4
      %s227 = int_to_ptr.vmem [resolvable:$true] %s226
      %s228 = sshll.u32 %s5, 4
      %s229 = int_to_ptr.hbm [resolvable:$true] %s228
      %231 = dma.vmem_to_hbm [thread:$0]  %s227, 16, %s229, [#allocation6]
    $region45: #{tpu_custom_call.1} parent=1 // pred_fallthru
      _
    // Predicated region
    $region46: #{tpu_custom_call.1} parent=1 // pred_check
      _
    $region47: #{tpu_custom_call.1} parent=1 // pred_check_branch
      %233 = sbr.rel (0) target = $region49
    $region48: #{tpu_custom_call.1} parent=1 // pred_region
      %235 = dma.done [#allocation6], 16
    $region49: #{tpu_custom_call.1} parent=1 // pred_fallthru
      _
    %236 = vsyncpa [#allocation5], 1
    %237 = vsyncpa [#allocation6], 1

</llo_original>
